<compile_context>
chip_gen: v7x
topology: tpu7x:2x2x1
jax: 0.10.0
libtpu: 0.0.40
codegen_flags: <defaults>
</compile_context>

<pallas_src>
import jax
import jax.numpy as jnp
from jax import lax
from jax.experimental import pallas as pl
from jax.experimental.pallas import tpu as pltpu

_LANE = 128
_SUBLANE = 8


def _round_up(x, m):
    return (x + m - 1) // m * m


def _head_kernel(hid_ref, lab_ref, w_ref, b_ref, probs_ref, loss_ref):
    # hid_ref:  (TB, H)  f32  CLS rows of the encoder output
    # lab_ref:  (TB, 1)  i32  labels
    # w_ref:    (H, Lp)  bf16 folded W1@W2, zero-padded columns
    # b_ref:    (1, Lp)  f32  folded b1@W2+b2, padded columns set to -1e30
    hid = hid_ref[...].astype(jnp.bfloat16)
    logits = jnp.dot(hid, w_ref[...], preferred_element_type=jnp.float32) + b_ref[...]

    # numerically-stable softmax; padded lanes are ~-1e30 so exp underflows to 0
    m = jnp.max(logits, axis=-1, keepdims=True)
    ex = jnp.exp(logits - m)
    denom = jnp.sum(ex, axis=-1, keepdims=True)
    probs_ref[...] = ex * pl.reciprocal(denom, approx=False)

    # per-example cross-entropy: logsumexp - picked_logit (in-kernel one-hot)
    lse = m + jnp.log(denom)
    col = lax.broadcasted_iota(jnp.int32, logits.shape, 1)
    picked = jnp.sum(jnp.where(col == lab_ref[...], logits, 0.0),
                     axis=-1, keepdims=True)
    loss_ref[...] = lse - picked


def classifier_head(hidden2d, labels2d, w12_pad, b12_pad, tb):
    Bp, _ = hidden2d.shape
    H, Lp = w12_pad.shape
    grid = (Bp // tb,)
    probs_pad, loss_per_ex = pl.pallas_call(
        _head_kernel,
        grid=grid,
        in_specs=[
            pl.BlockSpec((tb, H), lambda i: (i, 0)),    # CLS rows only (cols [0, H))
            pl.BlockSpec((tb, 1), lambda i: (i, 0)),    # labels
            pl.BlockSpec((H, Lp), lambda i: (0, 0)),    # folded weights (VMEM resident)
            pl.BlockSpec((1, Lp), lambda i: (0, 0)),    # folded bias   (VMEM resident)
        ],
        out_specs=(
            pl.BlockSpec((tb, Lp), lambda i: (i, 0)),
            pl.BlockSpec((tb, 1), lambda i: (i, 0)),
        ),
        out_shape=(
            jax.ShapeDtypeStruct((Bp, Lp), jnp.float32),
            jax.ShapeDtypeStruct((Bp, 1), jnp.float32),
        ),
        compiler_params=pltpu.CompilerParams(
            dimension_semantics=("parallel",),
            vmem_limit_bytes=32 * 1024 * 1024,
        ),
    )(hidden2d, labels2d, w12_pad, b12_pad)
    return probs_pad, loss_per_ex


def multi_class_classifier_forward(hidden, labels, params, num_labels):
    """hidden: (B, S, H) encoder output; labels: (B,) int32."""
    B, S, H = hidden.shape
    assert H % _LANE == 0  # TODO(synk): pad the hidden dim for widths not multiple of 128
    L = num_labels
    Lp = _round_up(max(L, _LANE), _LANE)

    # Fold the two affine layers (no nonlinearity between them in the module).
    w12 = params["w1"] @ params["w2"]                       # (H, L)
    b12 = params["b1"] @ params["w2"] + params["b2"]        # (1, L)
    w12_pad = jnp.zeros((H, Lp), jnp.float32).at[:, :L].set(w12).astype(jnp.bfloat16)
    b12_pad = jnp.full((1, Lp), -1e30, jnp.float32).at[:, :L].set(b12)

    # CLS pooling via BlockSpec: view hidden as (B, S*H); columns [0, H) are s=0 rows.
    hidden2d = hidden.reshape(B, S * H)
    labels2d = labels.astype(jnp.int32).reshape(B, 1)

    tb = min(256, _round_up(B, _SUBLANE))
    Bp = _round_up(B, tb)
    if Bp != B:
        hidden2d = jnp.pad(hidden2d, ((0, Bp - B), (0, 0)))
        labels2d = jnp.pad(labels2d, ((0, Bp - B), (0, 0)))

    probs_pad, loss_per_ex = classifier_head(hidden2d, labels2d, w12_pad, b12_pad, tb)

    probs = probs_pad[:B, :L]
    loss = jnp.mean(loss_per_ex[:B, 0])          # CrossEntropyLoss mean reduction
    preds = jnp.argmax(probs, axis=-1)           # == argmax(logits)
    return {"loss": loss, "pred": preds, "label": labels, "prob": probs}


def _init_linear(key, fan_in, fan_out):
    # matches nn.Linear default uniform(-1/sqrt(fan_in), 1/sqrt(fan_in))
    kw, kb = jax.random.split(key)
    bound = 1.0 / jnp.sqrt(fan_in)
    w = jax.random.uniform(kw, (fan_in, fan_out), jnp.float32, -bound, bound)
    b = jax.random.uniform(kb, (1, fan_out), jnp.float32, -bound, bound)
    return w, b


if __name__ == "__main__":
    # TODO(synk): the pretrained transformer encoder (AutoModel) is not reimplemented;
    # its output hidden states are synthesized deterministically.
    B, S, H, NUM_LABELS = 8, 8, 128, 16

    key = jax.random.PRNGKey(0)
    k_hid, k_lab, k_l1, k_l2 = jax.random.split(key, 4)

    hidden = jax.random.normal(k_hid, (B, S, H), jnp.float32)     # encoder output
    labels = jax.random.randint(k_lab, (B,), 0, NUM_LABELS, jnp.int32)

    w1, b1 = _init_linear(k_l1, H, H)            # one_more_layer: Linear(H, H)
    w2, b2 = _init_linear(k_l2, H, NUM_LABELS)   # classifier:     Linear(H, L)
    params = {"w1": w1, "b1": b1, "w2": w2, "b2": b2}

    outputs = multi_class_classifier_forward(hidden, labels, params, NUM_LABELS)
    jax.block_until_ready(outputs)

    # --- sanity checks -------------------------------------------------------
    hh = hidden[:, 0, :]
    # (a) matched-precision reference (same folded weights, same bf16 rounding)
    w12 = w1 @ w2
    b12 = b1 @ w2 + b2
    hh_b = hh.astype(jnp.bfloat16).astype(jnp.float32)
    w12_b = w12.astype(jnp.bfloat16).astype(jnp.float32)
    ref_logits = hh_b @ w12_b + b12
    ref_probs = jax.nn.softmax(ref_logits, -1)
    ref_loss = jnp.mean(
        jax.scipy.special.logsumexp(ref_logits, -1)
        - jnp.take_along_axis(ref_logits, labels[:, None], axis=-1)[:, 0])
    assert jnp.allclose(outputs["prob"], ref_probs, atol=1e-4)
    assert jnp.allclose(outputs["loss"], ref_loss, atol=1e-4)
    assert jnp.array_equal(outputs["pred"], jnp.argmax(ref_logits, -1))

    # (b) loose check against the original full-f32 two-layer head
    ref_logits_f32 = (hh @ w1 + b1) @ w2 + b2
    ref_probs_f32 = jax.nn.softmax(ref_logits_f32, -1)
    ref_loss_f32 = jnp.mean(
        jax.scipy.special.logsumexp(ref_logits_f32, -1)
        - jnp.take_along_axis(ref_logits_f32, labels[:, None], axis=-1)[:, 0])
    assert jnp.allclose(outputs["prob"], ref_probs_f32, atol=3e-2)
    assert jnp.allclose(outputs["loss"], ref_loss_f32, atol=3e-2)

    print("KERNEL_OK")
</pallas_src>

<mosaic_0001>
module attributes {stable_mosaic.version = 11 : i64} {
  func.func @_head_kernel(%arg0: i32, %arg1: memref<8x128xf32, #tpu.memory_space<vmem>>, %arg2: memref<8x1xi32, #tpu.memory_space<vmem>>, %arg3: memref<128x128xbf16, #tpu.memory_space<vmem>>, %arg4: memref<1x128xf32, #tpu.memory_space<vmem>>, %arg5: memref<8x128xf32, #tpu.memory_space<vmem>>, %arg6: memref<8x1xf32, #tpu.memory_space<vmem>>) attributes {dimension_semantics = [#tpu.dimension_semantics<parallel>], iteration_bounds = array<i64: 1>, scalar_prefetch = 0 : i64, scratch_operands = 0 : i64, tpu.core_type = #tpu.core_type<tc>, window_params = [{transform_indices = @transform_0, window_bounds = array<i64: 8, 128>}, {transform_indices = @transform_1, window_bounds = array<i64: 8, 1>}, {pipeline_mode = #tpu.pipeline_mode<synchronous>, transform_indices = @transform_2, window_bounds = array<i64: 128, 128>}, {pipeline_mode = #tpu.pipeline_mode<synchronous>, transform_indices = @transform_3, window_bounds = array<i64: 1, 128>}, {transform_indices = @transform_4, window_bounds = array<i64: 8, 128>}, {transform_indices = @transform_5, window_bounds = array<i64: 8, 1>}]} {
    %c0 = arith.constant 0 : index
    %c0_0 = arith.constant 0 : index
    %0 = vector.load %arg1[%c0, %c0_0] : memref<8x128xf32, #tpu.memory_space<vmem>>, vector<8x128xf32>
    %1 = arith.truncf %0 : vector<8x128xf32> to vector<8x128xbf16>
    %c0_1 = arith.constant 0 : index
    %c0_2 = arith.constant 0 : index
    %2 = vector.load %arg3[%c0_1, %c0_2] : memref<128x128xbf16, #tpu.memory_space<vmem>>, vector<128x128xbf16>
    %cst = arith.constant dense<0.000000e+00> : vector<8x128xf32>
    %3 = tpu.matmul %1, %2, %cst {dimension_numbers = #tpu.dot_dimension_numbers<[1], [0], [0], [1], [0, 0, 1, 1], [], []>} : vector<8x128xbf16>, vector<128x128xbf16>, vector<8x128xf32> -> vector<8x128xf32>
    %c0_3 = arith.constant 0 : index
    %c0_4 = arith.constant 0 : index
    %4 = vector.load %arg4[%c0_3, %c0_4] : memref<1x128xf32, #tpu.memory_space<vmem>>, vector<1x128xf32>
    %5 = vector.broadcast %4 : vector<1x128xf32> to vector<8x128xf32>
    %6 = arith.addf %3, %5 : vector<8x128xf32>
    %cst_5 = arith.constant dense<0xFF800000> : vector<8xf32>
    %7 = vector.multi_reduction <maximumf>, %6, %cst_5 [1] : vector<8x128xf32> to vector<8xf32>
    %8 = vector.shape_cast %7 : vector<8xf32> to vector<8x1xf32>
    %9 = vector.broadcast %8 : vector<8x1xf32> to vector<8x128xf32>
    %10 = arith.subf %6, %9 : vector<8x128xf32>
    %11 = math.exp %10 : vector<8x128xf32>
    %cst_6 = arith.constant dense<0.000000e+00> : vector<8xf32>
    %12 = vector.multi_reduction <add>, %11, %cst_6 [1] : vector<8x128xf32> to vector<8xf32>
    %13 = vector.shape_cast %12 : vector<8xf32> to vector<8x1xf32>
    %14 = tpu.reciprocal %13 : vector<8x1xf32> -> vector<8x1xf32>
    %15 = vector.broadcast %14 : vector<8x1xf32> to vector<8x128xf32>
    %16 = arith.mulf %11, %15 : vector<8x128xf32>
    %c0_7 = arith.constant 0 : index
    %c0_8 = arith.constant 0 : index
    %17 = vector.load %arg5[%c0_7, %c0_8] : memref<8x128xf32, #tpu.memory_space<vmem>>, vector<8x128xf32>
    tpu.vector_store %arg5[%c0_7, %c0_8], %16 {strides = array<i32>} : memref<8x128xf32, #tpu.memory_space<vmem>>, vector<8x128xf32>,
    %18 = math.log %13 : vector<8x1xf32>
    %19 = arith.addf %8, %18 : vector<8x1xf32>
    %20 = tpu.iota {dimensions = array<i32: 1>} : vector<8x128xi32>
    %c0_9 = arith.constant 0 : index
    %c0_10 = arith.constant 0 : index
    %21 = vector.load %arg2[%c0_9, %c0_10] : memref<8x1xi32, #tpu.memory_space<vmem>>, vector<8x1xi32>
    %22 = vector.broadcast %21 : vector<8x1xi32> to vector<8x128xi32>
    %23 = arith.cmpi eq, %20, %22 : vector<8x128xi32>
    %cst_11 = arith.constant 0.000000e+00 : f32
    %24 = vector.broadcast %cst_11 : f32 to vector<8x128xf32>
    %25 = arith.select %23, %6, %24 : vector<8x128xi1>, vector<8x128xf32>
    %cst_12 = arith.constant dense<0.000000e+00> : vector<8xf32>
    %26 = vector.multi_reduction <add>, %25, %cst_12 [1] : vector<8x128xf32> to vector<8xf32>
    %27 = vector.shape_cast %26 : vector<8xf32> to vector<8x1xf32>
    %28 = arith.subf %19, %27 : vector<8x1xf32>
    %c0_13 = arith.constant 0 : index
    %c0_14 = arith.constant 0 : index
    %29 = vector.load %arg6[%c0_13, %c0_14] : memref<8x1xf32, #tpu.memory_space<vmem>>, vector<8x1xf32>
    tpu.vector_store %arg6[%c0_13, %c0_14], %28 {strides = array<i32>} : memref<8x1xf32, #tpu.memory_space<vmem>>, vector<8x1xf32>,
    return
  }
  func.func @transform_0(%arg0: i32) -> (i32, i32) {
    %c0_i32 = arith.constant 0 : i32
    %c0_i32_0 = arith.constant 0 : i32
    return %arg0, %c0_i32 : i32, i32
  }
  func.func @transform_1(%arg0: i32) -> (i32, i32) {
    %c0_i32 = arith.constant 0 : i32
    %c0_i32_0 = arith.constant 0 : i32
    return %arg0, %c0_i32 : i32, i32
  }
  func.func @transform_2(%arg0: i32) -> (i32, i32) {
    %c0_i32 = arith.constant 0 : i32
    %c0_i32_0 = arith.constant 0 : i32
    %c0_i32_1 = arith.constant 0 : i32
    return %c0_i32, %c0_i32_0 : i32, i32
  }
  func.func @transform_3(%arg0: i32) -> (i32, i32) {
    %c0_i32 = arith.constant 0 : i32
    %c0_i32_0 = arith.constant 0 : i32
    %c0_i32_1 = arith.constant 0 : i32
    return %c0_i32, %c0_i32_0 : i32, i32
  }
  func.func @transform_4(%arg0: i32) -> (i32, i32) {
    %c0_i32 = arith.constant 0 : i32
    %c0_i32_0 = arith.constant 0 : i32
    return %arg0, %c0_i32 : i32, i32
  }
  func.func @transform_5(%arg0: i32) -> (i32, i32) {
    %c0_i32 = arith.constant 0 : i32
    %c0_i32_0 = arith.constant 0 : i32
    return %arg0, %c0_i32 : i32, i32
  }
}

</mosaic_0001>

<llo_original>
// kernel: tpu_custom_call.1
$region0: #{tpu_custom_call.1}
  #allocation0 [shape = 'u32[]', space=smem, size = 0x4, offset = 0x4, fixed_abs, tag = 'smem constant byte address 0x4 - core index']
  #allocation1 [shape = 'u32[144,128]{1,0:T(1,128)}', space=vmem, size = 0x12000, scoped, tag = 'internal scratch']
  %s0 = inlined_call_operand.hbm [shape: f32[8,1024], index: 0, kind: input, shape index: {}]
  %s1 = inlined_call_operand.vmem [shape: s32[8,1], index: 1, kind: input, shape index: {}]
  %s2 = inlined_call_operand.hbm [shape: bf16[128,128], index: 2, kind: input, shape index: {}]
  %s3 = inlined_call_operand.vmem [shape: f32[1,128], index: 3, kind: input, shape index: {}]
  %s4 = inlined_call_operand.hbm [shape: f32[8,128], index: 4, kind: output, shape index: {0}]
  %s5 = inlined_call_operand.vmem [shape: f32[8,1], index: 5, kind: output, shape index: {1}]
  %6 = xla_tuple %s4, %s5
  %s7 = sld [smem:[#allocation0]]
  $region42: #{tpu_custom_call.1} parent=0
    _
  %s9 = ssub.s32 1, %s7
  %s10 = scalar_select 0, %s9, %s7
  $region1: #{tpu_custom_call.1} parent=0
    #allocation2 [shape = 'u8[4096]{0}', space=vmem, size = 0x1000, scoped, tag = 'input window, operand 0, single buffered']
    #allocation3 [shape = 's32[1]{0}', space=sflag, size = 0x4, scoped, tag = 'scoped memory for tpu_custom_call.1']
    #allocation4 [shape = 's32[1]{0}', space=sflag, size = 0x4, scoped, tag = 'scoped memory for tpu_custom_call.1']
    #allocation5 [shape = 'u8[32768]{0}', space=vmem, size = 0x8000, scoped, tag = 'input window, operand 2, single buffered']
    #allocation6 [shape = 's32[1]{0}', space=sflag, size = 0x4, scoped, tag = 'scoped memory for tpu_custom_call.1']
    #allocation7 [shape = 'u8[4096]{0}', space=vmem, size = 0x1000, scoped, tag = 'output window, operand 0, single buffered']
    %11 = vsyncpa [#allocation3], 0
    %12 = vsyncpa [#allocation6], 0
    %13 = vsyncpa [#allocation4], 0
    // Predicated region
    $region2: #{tpu_custom_call.1} parent=1 // pred_check
      _
    $region3: #{tpu_custom_call.1} parent=1 // pred_check_branch
      %15 = sbr.rel (0) target = $region5
    $region4: #{tpu_custom_call.1} parent=1 // pred_region
      %s17 = ssub.s32 128, 128
      %18 = vsyncadd [#allocation3], %s17
      %s20 = sshll.u32 [#allocation2], 4
      %s21 = int_to_ptr.vmem [resolvable:$true] %s20
      %23 = dma.hbm_to_vmem [thread:$0]  %s0, 128, %s21, [#allocation3]
    $region5: #{tpu_custom_call.1} parent=1 // pred_fallthru
      _
    // Predicated region
    $region6: #{tpu_custom_call.1} parent=1 // pred_check
      _
    $region7: #{tpu_custom_call.1} parent=1 // pred_check_branch
      %25 = sbr.rel (0) target = $region9
    $region8: #{tpu_custom_call.1} parent=1 // pred_region
      _
    $region9: #{tpu_custom_call.1} parent=1 // pred_fallthru
      _
    // Predicated region
    $region10: #{tpu_custom_call.1} parent=1 // pred_check
      _
    $region11: #{tpu_custom_call.1} parent=1 // pred_check_branch
      %27 = sbr.rel (0) target = $region13
    $region12: #{tpu_custom_call.1} parent=1 // pred_region
      %s29 = ssub.s32 1024, 1024
      %30 = vsyncadd [#allocation6], %s29
      %s31 = sshll.u32 [#allocation5], 4
      %s32 = int_to_ptr.vmem [resolvable:$true] %s31
      %37 = dma.hbm_to_vmem [thread:$0]  %s2, 1024, %s32, [#allocation6], 64, 64, 4
    $region13: #{tpu_custom_call.1} parent=1 // pred_fallthru
      _
    // Predicated region
    $region14: #{tpu_custom_call.1} parent=1 // pred_check
      _
    $region15: #{tpu_custom_call.1} parent=1 // pred_check_branch
      %39 = sbr.rel (0) target = $region17
    $region16: #{tpu_custom_call.1} parent=1 // pred_region
      _
    $region17: #{tpu_custom_call.1} parent=1 // pred_fallthru
      _
    // Predicated region
    $region18: #{tpu_custom_call.1} parent=1 // pred_check
      _
    $region19: #{tpu_custom_call.1} parent=1 // pred_check_branch
      %41 = sbr.rel (0) target = $region21
    $region20: #{tpu_custom_call.1} parent=1 // pred_region
      %42 = dma.done [#allocation3], 128
    $region21: #{tpu_custom_call.1} parent=1 // pred_fallthru
      _
    // Predicated region
    $region22: #{tpu_custom_call.1} parent=1 // pred_check
      _
    $region23: #{tpu_custom_call.1} parent=1 // pred_check_branch
      %44 = sbr.rel (0) target = $region25
    $region24: #{tpu_custom_call.1} parent=1 // pred_region
      %45 = dma.done [#allocation6], 1024
    $region25: #{tpu_custom_call.1} parent=1 // pred_fallthru
      _
    %v47 = vld [vmem:[#allocation2] sm:$0xff]
    %v48 = vpack.c.bf16 %v47, %v47
    %v49 = vld [vmem:[#allocation5] sm:$0xf]
    %v50 = vld [vmem:[#allocation5 + $0x4] sm:$0xf]
    %v51 = vld [vmem:[#allocation5 + $0x8] sm:$0xf]
    %v52 = vld [vmem:[#allocation5 + $0xc] sm:$0xf]
    %v53 = vld [vmem:[#allocation5 + $0x10] sm:$0xf]
    %v54 = vld [vmem:[#allocation5 + $0x14] sm:$0xf]
    %v55 = vld [vmem:[#allocation5 + $0x18] sm:$0xf]
    %v56 = vld [vmem:[#allocation5 + $0x1c] sm:$0xf]
    %v57 = vld [vmem:[#allocation5 + $0x20] sm:$0xf]
    %v58 = vld [vmem:[#allocation5 + $0x24] sm:$0xf]
    %v59 = vld [vmem:[#allocation5 + $0x28] sm:$0xf]
    %v60 = vld [vmem:[#allocation5 + $0x2c] sm:$0xf]
    %v61 = vld [vmem:[#allocation5 + $0x30] sm:$0xf]
    %v62 = vld [vmem:[#allocation5 + $0x34] sm:$0xf]
    %v63 = vld [vmem:[#allocation5 + $0x38] sm:$0xf]
    %v64 = vld [vmem:[#allocation5 + $0x3c] sm:$0xf]
    %v65 = vld [vmem:[%s3] sm:$0x1]
    %v67 = vlaneseq
    %v68 = vshrl.u32 %v67, 7
    %v69 = vsub.s32 0, %v68
    %v70 = vrot.slane %v65, %v69
    %v88 = vunpack.c.l.b16 %v49
    %v89 = vunpack.c.l.b16 %v50
    %v90 = vunpack.c.l.b16 %v51
    %v91 = vunpack.c.l.b16 %v52
    %v92 = vunpack.c.l.b16 %v53
    %v93 = vunpack.c.l.b16 %v54
    %v94 = vunpack.c.l.b16 %v55
    %v95 = vunpack.c.l.b16 %v56
    %v96 = vunpack.c.l.b16 %v57
    %v97 = vunpack.c.l.b16 %v58
    %v98 = vunpack.c.l.b16 %v59
    %v99 = vunpack.c.l.b16 %v60
    %v100 = vunpack.c.l.b16 %v61
    %v101 = vunpack.c.l.b16 %v62
    %v102 = vunpack.c.l.b16 %v63
    %v103 = vunpack.c.l.b16 %v64
    %v104 = vpack.c.b16 %v89, %v88
    %v105 = vpack.c.b16 %v91, %v90
    %v106 = vpack.c.b16 %v93, %v92
    %v107 = vpack.c.b16 %v95, %v94
    %v108 = vpack.c.b16 %v97, %v96
    %v109 = vpack.c.b16 %v99, %v98
    %v110 = vpack.c.b16 %v101, %v100
    %v111 = vpack.c.b16 %v103, %v102
    %120 = vmatprep.subr.bf16.mxu0 0
    %121 = vmatpush1.bf16.msra.mxu0 %v104
    %122 = vmatprep.subr.bf16.mxu0 0
    %123 = vmatpush1.bf16.msra.mxu0 %v105
    %124 = vmatprep.subr.bf16.mxu0 0
    %125 = vmatpush1.bf16.msra.mxu0 %v106
    %126 = vmatprep.subr.bf16.mxu0 0
    %127 = vmatpush1.bf16.msra.mxu0 %v107
    %128 = vmatprep.subr.bf16.mxu0 0
    %129 = vmatpush1.bf16.msra.mxu0 %v108
    %130 = vmatprep.subr.bf16.mxu0 0
    %131 = vmatpush1.bf16.msra.mxu0 %v109
    %132 = vmatprep.subr.bf16.mxu0 0
    %133 = vmatpush1.bf16.msra.mxu0 %v110
    %134 = vmatprep.subr.bf16.mxu0 0
    %135 = vmatpush1.bf16.msra.mxu0 %v111
    %136 = vmatprep.subr.bf16.mxu0 0
    %137 = vmatpush1.bf16.msra.mxu0 0
    %138 = vmatprep.subr.bf16.mxu0 0
    %139 = vmatpush1.bf16.msra.mxu0 0
    %140 = vmatprep.subr.bf16.mxu0 0
    %141 = vmatpush1.bf16.msra.mxu0 0
    %142 = vmatprep.subr.bf16.mxu0 0
    %143 = vmatpush1.bf16.msra.mxu0 0
    %144 = vmatprep.subr.bf16.mxu0 0
    %145 = vmatpush1.bf16.msra.mxu0 0
    %146 = vmatprep.subr.bf16.mxu0 0
    %147 = vmatpush1.bf16.msra.mxu0 0
    %148 = vmatprep.subr.bf16.mxu0 0
    %149 = vmatpush1.bf16.msra.mxu0 0
    %150 = vmatprep.subr.bf16.mxu0 0
    %151 = vmatpush1.bf16.msra.mxu0 0
    %152 = vmatprep.mubr.bf16.mxu0 0
    %153 = vmatmul.mubr.bf16.gmra.mrb[0].mxu0 %v48
    %v154 = vpop.f32.mrb[0].mxu0
    %v155 = vadd.f32 %v70, %v154
    %v156 = vpop.f32.mrb[0].mxu0
    %v157 = vpop.f32.mrb[0].mxu0
    %v158 = vpop.f32.mrb[0].mxu0
    %159 = vdwg.mxu0
    %160 = vmax.xlane.f32.xlu0 %v155
    %v161 = vpop.xlane.xlu0 %160
    %v162 = vsub.f32 %v155, %v161
    %v163 = vmul.f32 %v162, 1.442695
    %v164 = vpow.pop %v163
    %165 = vadd.xlane.f32.xlu0 %v164
    %v166 = vpop.xlane.xlu0 %165
    %v167 = vrcp.pop %v166
    %v168 = vmul.f32 %v164, %v167
    %169 = vst [vmem:[#allocation7] sm:$0xff] %v168
    %v170 = vlog2.pop %v166
    %v171 = vmul.f32 %v170, 0.6931472
    %v172 = vadd.f32 %v161, %v171
    %v173 = vlaneseq
    %v174 = vand.u32 %v173, 127
    %v175 = vld [vmem:[%s1] sm:$0xff]
    %176 = vset.pattern.permute.xlu0 0
    %177 = vperm.xlu0 %176, %v175
    %v178 = vpop.permute.xlu0 %177
    %vm179 = vcmp.eq.s32.totalorder %v174, %v178
    %v180 = vsel %vm179, %v155, 0.0
    %181 = vadd.xlane.f32.xlu0 %v180
    %v182 = vpop.xlane.xlu0 %181
    %v183 = vsub.f32 %v172, %v182
    %vm184 = vcmask 7168
    %185 = vst.msk [vmem:[%s5] sm:$0xff] %vm184, %v183
    // Predicated region
    $region26: #{tpu_custom_call.1} parent=1 // pred_check
      _
    $region27: #{tpu_custom_call.1} parent=1 // pred_check_branch
      %187 = sbr.rel (0) target = $region29
    $region28: #{tpu_custom_call.1} parent=1 // pred_region
      %s189 = ssub.s32 128, 128
      %190 = vsyncadd [#allocation4], %s189
      %s192 = sshll.u32 [#allocation7], 4
      %s193 = int_to_ptr.vmem [resolvable:$true] %s192
      %195 = dma.vmem_to_hbm [thread:$0]  %s193, 128, %s4, [#allocation4]
    $region29: #{tpu_custom_call.1} parent=1 // pred_fallthru
      _
    // Predicated region
    $region30: #{tpu_custom_call.1} parent=1 // pred_check
      _
    $region31: #{tpu_custom_call.1} parent=1 // pred_check_branch
      %197 = sbr.rel (0) target = $region33
    $region32: #{tpu_custom_call.1} parent=1 // pred_region
      _
    $region33: #{tpu_custom_call.1} parent=1 // pred_fallthru
      _
    // Predicated region
    $region34: #{tpu_custom_call.1} parent=1 // pred_check
      _
    $region35: #{tpu_custom_call.1} parent=1 // pred_check_branch
      %199 = sbr.rel (0) target = $region37
    $region36: #{tpu_custom_call.1} parent=1 // pred_region
      %200 = dma.done [#allocation4], 128
    $region37: #{tpu_custom_call.1} parent=1 // pred_fallthru
      _
    // Predicated region
    $region38: #{tpu_custom_call.1} parent=1 // pred_check
      _
    $region39: #{tpu_custom_call.1} parent=1 // pred_check_branch
      %202 = sbr.rel (0) target = $region41
    $region40: #{tpu_custom_call.1} parent=1 // pred_region
      _
    $region41: #{tpu_custom_call.1} parent=1 // pred_fallthru
      _
    %203 = vsyncpa [#allocation3], 1
    %204 = vsyncpa [#allocation6], 1
    %205 = vsyncpa [#allocation4], 1

</llo_original>
